<compile_context>
chip_gen: v7x
topology: tpu7x:2x2x1
jax: 0.10.0
libtpu: 0.0.40
codegen_flags: <defaults>
</compile_context>

<pallas_src>
import functools

import numpy as np
import jax
import jax.numpy as jnp
from jax.experimental import pallas as pl
from jax.experimental.pallas import tpu as pltpu

EPS = 1e-5


def _conv_bn_relu_kernel(a_ref, w_ref, b_ref, gb_ref, o_ref, col_ref, *,
                         k, dilation, w_out, hw, n_img):
    """Fused conv (folded-K matmul) + training-mode BatchNorm + ReLU.

    a_ref:   [N, k, C_in, Apad]   k W-shifted copies of padded image, (h,w)-flat
    w_ref:   [C_out, k*k*C_in]    weights, K ordered (h-tap, w-tap, c_in)
    b_ref:   [C_out, 1]           conv bias
    gb_ref:  [2, C_out, 1]        BN gamma / beta
    o_ref:   [N, C_out, HW]       output (lane-dense, HW multiple of 128)
    col_ref: [k*k*C_in, N*HW]     VMEM scratch: folded-K RHS for the single dot
    """
    c_in = a_ref.shape[2]
    # Gather all k*k taps of all images into the folded-K RHS with plain static
    # slice stores (no pltpu.roll, no k*k-inflated HBM traffic).
    for b in range(n_img):
        for j in range(k):                      # W taps: pre-shifted copies
            row = a_ref[b, j]                   # [C_in, Apad]
            for i in range(k):                  # H taps: static lane windows
                start = i * dilation * w_out
                tap = i * k + j
                col_ref[tap * c_in:(tap + 1) * c_in, b * hw:(b + 1) * hw] = (
                    row[:, start:start + hw])

    # One MXU push over the folded contraction dim, f32 accumulation, + bias.
    y = jnp.dot(w_ref[...], col_ref[...],
                preferred_element_type=jnp.float32) + b_ref[...]   # [C_out, N*HW]

    # Training-mode BatchNorm batch stats over (N, H, W) == all lanes of y.
    # Variance with mean subtraction (no E[y^2]-E[y]^2 cancellation).
    inv_count = 1.0 / float(n_img * hw)
    mean = jnp.sum(y, axis=1, keepdims=True) * inv_count
    d = y - mean
    var = jnp.sum(d * d, axis=1, keepdims=True) * inv_count
    scale = gb_ref[0] * jax.lax.rsqrt(var + EPS)          # gamma / sqrt(var+eps)
    out = jnp.maximum(d * scale + gb_ref[1], 0.0)         # BN affine + ReLU

    for b in range(n_img):                                 # lane-dense stores
        o_ref[b] = out[:, b * hw:(b + 1) * hw]


@functools.partial(jax.jit, static_argnames=("kernel_size", "stride", "dilation",
                                             "groups", "use_bf16"))
def conv_block(x, weight, bias, gamma, beta, *, kernel_size, stride=1, dilation=1,
               groups=1, use_bf16=False):
    """x: [N, C_in, H, W] float32 (NCHW, like PyTorch). Returns NCHW float32."""
    assert groups == 1  # TODO(synk): grouped conv not implemented (module used with groups=1)
    assert stride == 1  # TODO(synk): stride>1 needs strided H/W windows; not needed here

    N, C_in, H, W = x.shape
    C_out = weight.shape[0]
    k = kernel_size
    pad = ((k - 1) // 2) * dilation

    # Reflect padding (PyTorch padding_mode='reflect' == jnp.pad mode='reflect').
    xp = jnp.pad(x, ((0, 0), (0, 0), (pad, pad), (pad, pad)), mode="reflect")
    Hp, Wp = H + 2 * pad, W + 2 * pad
    H_out = Hp - dilation * (k - 1)
    W_out = Wp - dilation * (k - 1)
    HW = H_out * W_out
    HpW = Hp * W_out
    Apad = ((HpW + 127) // 128) * 128        # lane-pad so in-kernel windows stay in-bounds

    op_dtype = jnp.bfloat16 if use_bf16 else jnp.float32   # MXU operand dtype (f32 acc)

    # k W-shifted copies (k x the input, NOT k*k x im2col), flattened (h,w)-major so
    # every H-tap is a contiguous static lane window starting at i*dilation*W_out.
    shifts = [xp[:, :, :, j * dilation: j * dilation + W_out] for j in range(k)]
    a = jnp.stack(shifts, axis=1).reshape(N, k, C_in, HpW).astype(op_dtype)
    if Apad != HpW:
        a = jnp.pad(a, ((0, 0), (0, 0), (0, 0), (0, Apad - HpW)))

    # weight [C_out, C_in, kh, kw] -> [C_out, k*k*C_in], K ordered (kh, kw, c_in)
    # to match the col scratch row index (i*k + j)*C_in + ci.
    w2 = weight.transpose(0, 2, 3, 1).reshape(C_out, k * k * C_in).astype(op_dtype)
    b2 = bias.reshape(C_out, 1).astype(jnp.float32)
    gb = jnp.stack([gamma, beta], axis=0).reshape(2, C_out, 1).astype(jnp.float32)

    itemsize = 2 if use_bf16 else 4
    flops = 2 * N * HW * C_in * k * k * C_out + 10 * N * C_out * HW
    bytes_accessed = (itemsize * (N * k * C_in * Apad + C_out * k * k * C_in)
                      + 4 * (C_out + 2 * C_out + N * C_out * HW))

    kern = functools.partial(_conv_bn_relu_kernel, k=k, dilation=dilation,
                             w_out=W_out, hw=HW, n_img=N)
    out = pl.pallas_call(
        kern,
        out_shape=jax.ShapeDtypeStruct((N, C_out, HW), jnp.float32),
        grid=(1,),
        in_specs=[
            pl.BlockSpec((N, k, C_in, Apad), lambda g: (0, 0, 0, 0)),
            pl.BlockSpec((C_out, k * k * C_in), lambda g: (0, 0)),
            pl.BlockSpec((C_out, 1), lambda g: (0, 0)),
            pl.BlockSpec((2, C_out, 1), lambda g: (0, 0, 0)),
        ],
        out_specs=pl.BlockSpec((N, C_out, HW), lambda g: (0, 0, 0)),
        scratch_shapes=[pltpu.VMEM((k * k * C_in, N * HW), op_dtype)],
        compiler_params=pltpu.CompilerParams(dimension_semantics=("arbitrary",)),
        cost_estimate=pl.CostEstimate(flops=flops, transcendentals=C_out,
                                      bytes_accessed=bytes_accessed),
    )(a, w2, b2, gb)

    # [N, C_out, H*W] -> NCHW is a metadata-only reshape (no transpose pass).
    return out.reshape(N, C_out, H_out, W_out)


def _reference(x, weight, bias, gamma, beta, *, kernel_size, stride=1, dilation=1):
    """Pure-JAX reference of the same forward (for sanity checking)."""
    pad = ((kernel_size - 1) // 2) * dilation
    xp = jnp.pad(x, ((0, 0), (0, 0), (pad, pad), (pad, pad)), mode="reflect")
    y = jax.lax.conv_general_dilated(
        xp, weight,
        window_strides=(stride, stride),
        padding="VALID",
        rhs_dilation=(dilation, dilation),
        dimension_numbers=("NCHW", "OIHW", "NCHW"),
        precision=jax.lax.Precision.HIGHEST,
    ) + bias.reshape(1, -1, 1, 1)
    mean = jnp.mean(y, axis=(0, 2, 3), keepdims=True)
    var = jnp.mean((y - mean) ** 2, axis=(0, 2, 3), keepdims=True)
    y = (y - mean) * jax.lax.rsqrt(var + EPS)
    y = y * gamma.reshape(1, -1, 1, 1) + beta.reshape(1, -1, 1, 1)
    return jnp.maximum(y, 0.0)


if __name__ == "__main__":
    # ConvBlock(C_in=4, C_out=8, kernel_size=3, stride=1, dilation=1, groups=1)
    N, C_in, H, W = 2, 4, 16, 16
    C_out, k = 8, 3

    key = jax.random.PRNGKey(0)
    kx, kw, kb, kg, kbe = jax.random.split(key, 5)
    x = jax.random.normal(kx, (N, C_in, H, W), dtype=jnp.float32)
    weight = jax.random.normal(kw, (C_out, C_in, k, k), dtype=jnp.float32) * 0.1
    bias = jax.random.normal(kb, (C_out,), dtype=jnp.float32) * 0.1
    gamma = 1.0 + 0.1 * jax.random.normal(kg, (C_out,), dtype=jnp.float32)
    beta = 0.1 * jax.random.normal(kbe, (C_out,), dtype=jnp.float32)

    out = conv_block(x, weight, bias, gamma, beta,
                     kernel_size=k, stride=1, dilation=1, groups=1)
    out = jax.block_until_ready(out)

    ref = _reference(x, weight, bias, gamma, beta, kernel_size=k, stride=1, dilation=1)
    np.testing.assert_allclose(np.asarray(out), np.asarray(ref), rtol=1e-3, atol=1e-3)

    print("KERNEL_OK")
</pallas_src>

<mosaic_0001>
module attributes {stable_mosaic.version = 11 : i64} {
  func.func @_conv_bn_relu_kernel(%arg0: i32, %arg1: memref<2x3x4x384xf32, #tpu.memory_space<vmem>>, %arg2: memref<8x36xf32, #tpu.memory_space<vmem>>, %arg3: memref<8x1xf32, #tpu.memory_space<vmem>>, %arg4: memref<2x8x1xf32, #tpu.memory_space<vmem>>, %arg5: memref<2x8x256xf32, #tpu.memory_space<vmem>>, %arg6: memref<36x512xf32, #tpu.memory_space<vmem>>) attributes {dimension_semantics = [#tpu.dimension_semantics<arbitrary>], iteration_bounds = array<i64: 1>, scalar_prefetch = 0 : i64, scratch_operands = 1 : i64, tpu.core_type = #tpu.core_type<tc>, window_params = [{pipeline_mode = #tpu.pipeline_mode<synchronous>, transform_indices = @transform_0, window_bounds = array<i64: 2, 3, 4, 384>}, {pipeline_mode = #tpu.pipeline_mode<synchronous>, transform_indices = @transform_1, window_bounds = array<i64: 8, 36>}, {pipeline_mode = #tpu.pipeline_mode<synchronous>, transform_indices = @transform_2, window_bounds = array<i64: 8, 1>}, {pipeline_mode = #tpu.pipeline_mode<synchronous>, transform_indices = @transform_3, window_bounds = array<i64: 2, 8, 1>}, {pipeline_mode = #tpu.pipeline_mode<synchronous>, transform_indices = @transform_4, window_bounds = array<i64: 2, 8, 256>}]} {
    %c0 = arith.constant 0 : index
    %c0_0 = arith.constant 0 : index
    %c0_1 = arith.constant 0 : index
    %c0_2 = arith.constant 0 : index
    %0 = vector.load %arg1[%c0, %c0_0, %c0_1, %c0_2] : memref<2x3x4x384xf32, #tpu.memory_space<vmem>>, vector<1x1x4x384xf32>
    %1 = vector.shape_cast %0 : vector<1x1x4x384xf32> to vector<4x384xf32>
    %2 = vector.extract_strided_slice %1 {offsets = [0, 0], sizes = [4, 256], strides = [1, 1]} : vector<4x384xf32> to vector<4x256xf32>
    %c0_3 = arith.constant 0 : index
    %c0_4 = arith.constant 0 : index
    %3 = vector.load %arg6[%c0_3, %c0_4] : memref<36x512xf32, #tpu.memory_space<vmem>>, vector<4x256xf32>
    tpu.vector_store %arg6[%c0_3, %c0_4], %2 {strides = array<i32>} : memref<36x512xf32, #tpu.memory_space<vmem>>, vector<4x256xf32>,
    %4 = vector.extract_strided_slice %1 {offsets = [0, 16], sizes = [4, 256], strides = [1, 1]} : vector<4x384xf32> to vector<4x256xf32>
    %c12 = arith.constant 12 : index
    %c0_5 = arith.constant 0 : index
    %5 = vector.load %arg6[%c12, %c0_5] : memref<36x512xf32, #tpu.memory_space<vmem>>, vector<4x256xf32>
    tpu.vector_store %arg6[%c12, %c0_5], %4 {strides = array<i32>} : memref<36x512xf32, #tpu.memory_space<vmem>>, vector<4x256xf32>,
    %6 = vector.extract_strided_slice %1 {offsets = [0, 32], sizes = [4, 256], strides = [1, 1]} : vector<4x384xf32> to vector<4x256xf32>
    %c24 = arith.constant 24 : index
    %c0_6 = arith.constant 0 : index
    %7 = vector.load %arg6[%c24, %c0_6] : memref<36x512xf32, #tpu.memory_space<vmem>>, vector<4x256xf32>
    tpu.vector_store %arg6[%c24, %c0_6], %6 {strides = array<i32>} : memref<36x512xf32, #tpu.memory_space<vmem>>, vector<4x256xf32>,
    %c0_7 = arith.constant 0 : index
    %c1 = arith.constant 1 : index
    %c0_8 = arith.constant 0 : index
    %c0_9 = arith.constant 0 : index
    %8 = vector.load %arg1[%c0_7, %c1, %c0_8, %c0_9] : memref<2x3x4x384xf32, #tpu.memory_space<vmem>>, vector<1x1x4x384xf32>
    %9 = vector.shape_cast %8 : vector<1x1x4x384xf32> to vector<4x384xf32>
    %10 = vector.extract_strided_slice %9 {offsets = [0, 0], sizes = [4, 256], strides = [1, 1]} : vector<4x384xf32> to vector<4x256xf32>
    %c4 = arith.constant 4 : index
    %c0_10 = arith.constant 0 : index
    %11 = vector.load %arg6[%c4, %c0_10] : memref<36x512xf32, #tpu.memory_space<vmem>>, vector<4x256xf32>
    tpu.vector_store %arg6[%c4, %c0_10], %10 {strides = array<i32>} : memref<36x512xf32, #tpu.memory_space<vmem>>, vector<4x256xf32>,
    %12 = vector.extract_strided_slice %9 {offsets = [0, 16], sizes = [4, 256], strides = [1, 1]} : vector<4x384xf32> to vector<4x256xf32>
    %c16 = arith.constant 16 : index
    %c0_11 = arith.constant 0 : index
    %13 = vector.load %arg6[%c16, %c0_11] : memref<36x512xf32, #tpu.memory_space<vmem>>, vector<4x256xf32>
    tpu.vector_store %arg6[%c16, %c0_11], %12 {strides = array<i32>} : memref<36x512xf32, #tpu.memory_space<vmem>>, vector<4x256xf32>,
    %14 = vector.extract_strided_slice %9 {offsets = [0, 32], sizes = [4, 256], strides = [1, 1]} : vector<4x384xf32> to vector<4x256xf32>
    %c28 = arith.constant 28 : index
    %c0_12 = arith.constant 0 : index
    %15 = vector.load %arg6[%c28, %c0_12] : memref<36x512xf32, #tpu.memory_space<vmem>>, vector<4x256xf32>
    tpu.vector_store %arg6[%c28, %c0_12], %14 {strides = array<i32>} : memref<36x512xf32, #tpu.memory_space<vmem>>, vector<4x256xf32>,
    %c0_13 = arith.constant 0 : index
    %c2 = arith.constant 2 : index
    %c0_14 = arith.constant 0 : index
    %c0_15 = arith.constant 0 : index
    %16 = vector.load %arg1[%c0_13, %c2, %c0_14, %c0_15] : memref<2x3x4x384xf32, #tpu.memory_space<vmem>>, vector<1x1x4x384xf32>
    %17 = vector.shape_cast %16 : vector<1x1x4x384xf32> to vector<4x384xf32>
    %18 = vector.extract_strided_slice %17 {offsets = [0, 0], sizes = [4, 256], strides = [1, 1]} : vector<4x384xf32> to vector<4x256xf32>
    %c8 = arith.constant 8 : index
    %c0_16 = arith.constant 0 : index
    %19 = vector.load %arg6[%c8, %c0_16] : memref<36x512xf32, #tpu.memory_space<vmem>>, vector<4x256xf32>
    tpu.vector_store %arg6[%c8, %c0_16], %18 {strides = array<i32>} : memref<36x512xf32, #tpu.memory_space<vmem>>, vector<4x256xf32>,
    %20 = vector.extract_strided_slice %17 {offsets = [0, 16], sizes = [4, 256], strides = [1, 1]} : vector<4x384xf32> to vector<4x256xf32>
    %c20 = arith.constant 20 : index
    %c0_17 = arith.constant 0 : index
    %21 = vector.load %arg6[%c20, %c0_17] : memref<36x512xf32, #tpu.memory_space<vmem>>, vector<4x256xf32>
    tpu.vector_store %arg6[%c20, %c0_17], %20 {strides = array<i32>} : memref<36x512xf32, #tpu.memory_space<vmem>>, vector<4x256xf32>,
    %22 = vector.extract_strided_slice %17 {offsets = [0, 32], sizes = [4, 256], strides = [1, 1]} : vector<4x384xf32> to vector<4x256xf32>
    %c32 = arith.constant 32 : index
    %c0_18 = arith.constant 0 : index
    %23 = vector.load %arg6[%c32, %c0_18] : memref<36x512xf32, #tpu.memory_space<vmem>>, vector<4x256xf32>
    tpu.vector_store %arg6[%c32, %c0_18], %22 {strides = array<i32>} : memref<36x512xf32, #tpu.memory_space<vmem>>, vector<4x256xf32>,
    %c1_19 = arith.constant 1 : index
    %c0_20 = arith.constant 0 : index
    %c0_21 = arith.constant 0 : index
    %c0_22 = arith.constant 0 : index
    %24 = vector.load %arg1[%c1_19, %c0_20, %c0_21, %c0_22] : memref<2x3x4x384xf32, #tpu.memory_space<vmem>>, vector<1x1x4x384xf32>
    %25 = vector.shape_cast %24 : vector<1x1x4x384xf32> to vector<4x384xf32>
    %26 = vector.extract_strided_slice %25 {offsets = [0, 0], sizes = [4, 256], strides = [1, 1]} : vector<4x384xf32> to vector<4x256xf32>
    %c0_23 = arith.constant 0 : index
    %c256 = arith.constant 256 : index
    %27 = vector.load %arg6[%c0_23, %c256] : memref<36x512xf32, #tpu.memory_space<vmem>>, vector<4x256xf32>
    tpu.vector_store %arg6[%c0_23, %c256], %26 {strides = array<i32>} : memref<36x512xf32, #tpu.memory_space<vmem>>, vector<4x256xf32>,
    %28 = vector.extract_strided_slice %25 {offsets = [0, 16], sizes = [4, 256], strides = [1, 1]} : vector<4x384xf32> to vector<4x256xf32>
    %c12_24 = arith.constant 12 : index
    %c256_25 = arith.constant 256 : index
    %29 = vector.load %arg6[%c12_24, %c256_25] : memref<36x512xf32, #tpu.memory_space<vmem>>, vector<4x256xf32>
    tpu.vector_store %arg6[%c12_24, %c256_25], %28 {strides = array<i32>} : memref<36x512xf32, #tpu.memory_space<vmem>>, vector<4x256xf32>,
    %30 = vector.extract_strided_slice %25 {offsets = [0, 32], sizes = [4, 256], strides = [1, 1]} : vector<4x384xf32> to vector<4x256xf32>
    %c24_26 = arith.constant 24 : index
    %c256_27 = arith.constant 256 : index
    %31 = vector.load %arg6[%c24_26, %c256_27] : memref<36x512xf32, #tpu.memory_space<vmem>>, vector<4x256xf32>
    tpu.vector_store %arg6[%c24_26, %c256_27], %30 {strides = array<i32>} : memref<36x512xf32, #tpu.memory_space<vmem>>, vector<4x256xf32>,
    %c1_28 = arith.constant 1 : index
    %c1_29 = arith.constant 1 : index
    %c0_30 = arith.constant 0 : index
    %c0_31 = arith.constant 0 : index
    %32 = vector.load %arg1[%c1_28, %c1_29, %c0_30, %c0_31] : memref<2x3x4x384xf32, #tpu.memory_space<vmem>>, vector<1x1x4x384xf32>
    %33 = vector.shape_cast %32 : vector<1x1x4x384xf32> to vector<4x384xf32>
    %34 = vector.extract_strided_slice %33 {offsets = [0, 0], sizes = [4, 256], strides = [1, 1]} : vector<4x384xf32> to vector<4x256xf32>
    %c4_32 = arith.constant 4 : index
    %c256_33 = arith.constant 256 : index
    %35 = vector.load %arg6[%c4_32, %c256_33] : memref<36x512xf32, #tpu.memory_space<vmem>>, vector<4x256xf32>
    tpu.vector_store %arg6[%c4_32, %c256_33], %34 {strides = array<i32>} : memref<36x512xf32, #tpu.memory_space<vmem>>, vector<4x256xf32>,
    %36 = vector.extract_strided_slice %33 {offsets = [0, 16], sizes = [4, 256], strides = [1, 1]} : vector<4x384xf32> to vector<4x256xf32>
    %c16_34 = arith.constant 16 : index
    %c256_35 = arith.constant 256 : index
    %37 = vector.load %arg6[%c16_34, %c256_35] : memref<36x512xf32, #tpu.memory_space<vmem>>, vector<4x256xf32>
    tpu.vector_store %arg6[%c16_34, %c256_35], %36 {strides = array<i32>} : memref<36x512xf32, #tpu.memory_space<vmem>>, vector<4x256xf32>,
    %38 = vector.extract_strided_slice %33 {offsets = [0, 32], sizes = [4, 256], strides = [1, 1]} : vector<4x384xf32> to vector<4x256xf32>
    %c28_36 = arith.constant 28 : index
    %c256_37 = arith.constant 256 : index
    %39 = vector.load %arg6[%c28_36, %c256_37] : memref<36x512xf32, #tpu.memory_space<vmem>>, vector<4x256xf32>
    tpu.vector_store %arg6[%c28_36, %c256_37], %38 {strides = array<i32>} : memref<36x512xf32, #tpu.memory_space<vmem>>, vector<4x256xf32>,
    %c1_38 = arith.constant 1 : index
    %c2_39 = arith.constant 2 : index
    %c0_40 = arith.constant 0 : index
    %c0_41 = arith.constant 0 : index
    %40 = vector.load %arg1[%c1_38, %c2_39, %c0_40, %c0_41] : memref<2x3x4x384xf32, #tpu.memory_space<vmem>>, vector<1x1x4x384xf32>
    %41 = vector.shape_cast %40 : vector<1x1x4x384xf32> to vector<4x384xf32>
    %42 = vector.extract_strided_slice %41 {offsets = [0, 0], sizes = [4, 256], strides = [1, 1]} : vector<4x384xf32> to vector<4x256xf32>
    %c8_42 = arith.constant 8 : index
    %c256_43 = arith.constant 256 : index
    %43 = vector.load %arg6[%c8_42, %c256_43] : memref<36x512xf32, #tpu.memory_space<vmem>>, vector<4x256xf32>
    tpu.vector_store %arg6[%c8_42, %c256_43], %42 {strides = array<i32>} : memref<36x512xf32, #tpu.memory_space<vmem>>, vector<4x256xf32>,
    %44 = vector.extract_strided_slice %41 {offsets = [0, 16], sizes = [4, 256], strides = [1, 1]} : vector<4x384xf32> to vector<4x256xf32>
    %c20_44 = arith.constant 20 : index
    %c256_45 = arith.constant 256 : index
    %45 = vector.load %arg6[%c20_44, %c256_45] : memref<36x512xf32, #tpu.memory_space<vmem>>, vector<4x256xf32>
    tpu.vector_store %arg6[%c20_44, %c256_45], %44 {strides = array<i32>} : memref<36x512xf32, #tpu.memory_space<vmem>>, vector<4x256xf32>,
    %46 = vector.extract_strided_slice %41 {offsets = [0, 32], sizes = [4, 256], strides = [1, 1]} : vector<4x384xf32> to vector<4x256xf32>
    %c32_46 = arith.constant 32 : index
    %c256_47 = arith.constant 256 : index
    %47 = vector.load %arg6[%c32_46, %c256_47] : memref<36x512xf32, #tpu.memory_space<vmem>>, vector<4x256xf32>
    tpu.vector_store %arg6[%c32_46, %c256_47], %46 {strides = array<i32>} : memref<36x512xf32, #tpu.memory_space<vmem>>, vector<4x256xf32>,
    %c0_48 = arith.constant 0 : index
    %c0_49 = arith.constant 0 : index
    %48 = vector.load %arg2[%c0_48, %c0_49] : memref<8x36xf32, #tpu.memory_space<vmem>>, vector<8x36xf32>
    %c0_50 = arith.constant 0 : index
    %c0_51 = arith.constant 0 : index
    %49 = vector.load %arg6[%c0_50, %c0_51] : memref<36x512xf32, #tpu.memory_space<vmem>>, vector<36x512xf32>
    %cst = arith.constant dense<0.000000e+00> : vector<8x512xf32>
    %50 = tpu.matmul %48, %49, %cst {dimension_numbers = #tpu.dot_dimension_numbers<[1], [0], [0], [1], [0, 0, 1, 1], [], []>} : vector<8x36xf32>, vector<36x512xf32>, vector<8x512xf32> -> vector<8x512xf32>
    %c0_52 = arith.constant 0 : index
    %c0_53 = arith.constant 0 : index
    %51 = vector.load %arg3[%c0_52, %c0_53] : memref<8x1xf32, #tpu.memory_space<vmem>>, vector<8x1xf32>
    %52 = vector.broadcast %51 : vector<8x1xf32> to vector<8x512xf32>
    %53 = arith.addf %50, %52 : vector<8x512xf32>
    %cst_54 = arith.constant dense<0.000000e+00> : vector<8xf32>
    %54 = vector.multi_reduction <add>, %53, %cst_54 [1] : vector<8x512xf32> to vector<8xf32>
    %55 = vector.shape_cast %54 : vector<8xf32> to vector<8x1xf32>
    %cst_55 = arith.constant 0.001953125 : f32
    %56 = vector.broadcast %cst_55 : f32 to vector<8x1xf32>
    %57 = arith.mulf %55, %56 : vector<8x1xf32>
    %58 = vector.broadcast %57 : vector<8x1xf32> to vector<8x512xf32>
    %59 = arith.subf %53, %58 : vector<8x512xf32>
    %60 = arith.mulf %59, %59 : vector<8x512xf32>
    %cst_56 = arith.constant dense<0.000000e+00> : vector<8xf32>
    %61 = vector.multi_reduction <add>, %60, %cst_56 [1] : vector<8x512xf32> to vector<8xf32>
    %62 = vector.shape_cast %61 : vector<8xf32> to vector<8x1xf32>
    %cst_57 = arith.constant 0.001953125 : f32
    %63 = vector.broadcast %cst_57 : f32 to vector<8x1xf32>
    %64 = arith.mulf %62, %63 : vector<8x1xf32>
    %c0_58 = arith.constant 0 : index
    %c0_59 = arith.constant 0 : index
    %c0_60 = arith.constant 0 : index
    %65 = vector.load %arg4[%c0_58, %c0_59, %c0_60] : memref<2x8x1xf32, #tpu.memory_space<vmem>>, vector<1x8x1xf32>
    %66 = vector.shape_cast %65 : vector<1x8x1xf32> to vector<8x1xf32>
    %cst_61 = arith.constant 9.99999974E-6 : f32
    %67 = vector.broadcast %cst_61 : f32 to vector<8x1xf32>
    %68 = arith.addf %64, %67 : vector<8x1xf32>
    %69 = math.rsqrt %68 : vector<8x1xf32>
    %70 = arith.mulf %66, %69 : vector<8x1xf32>
    %71 = vector.broadcast %70 : vector<8x1xf32> to vector<8x512xf32>
    %72 = arith.mulf %59, %71 : vector<8x512xf32>
    %c1_62 = arith.constant 1 : index
    %c0_63 = arith.constant 0 : index
    %c0_64 = arith.constant 0 : index
    %73 = vector.load %arg4[%c1_62, %c0_63, %c0_64] : memref<2x8x1xf32, #tpu.memory_space<vmem>>, vector<1x8x1xf32>
    %74 = vector.shape_cast %73 : vector<1x8x1xf32> to vector<8x1xf32>
    %75 = vector.broadcast %74 : vector<8x1xf32> to vector<8x512xf32>
    %76 = arith.addf %72, %75 : vector<8x512xf32>
    %cst_65 = arith.constant 0.000000e+00 : f32
    %77 = vector.broadcast %cst_65 : f32 to vector<8x512xf32>
    %78 = arith.maximumf %76, %77 : vector<8x512xf32>
    %79 = vector.extract_strided_slice %78 {offsets = [0, 0], sizes = [8, 256], strides = [1, 1]} : vector<8x512xf32> to vector<8x256xf32>
    %c0_66 = arith.constant 0 : index
    %c0_67 = arith.constant 0 : index
    %c0_68 = arith.constant 0 : index
    %80 = vector.load %arg5[%c0_66, %c0_67, %c0_68] : memref<2x8x256xf32, #tpu.memory_space<vmem>>, vector<1x8x256xf32>
    %81 = vector.shape_cast %80 : vector<1x8x256xf32> to vector<8x256xf32>
    %82 = vector.shape_cast %79 : vector<8x256xf32> to vector<1x8x256xf32>
    tpu.vector_store %arg5[%c0_66, %c0_67, %c0_68], %82 {strides = array<i32>} : memref<2x8x256xf32, #tpu.memory_space<vmem>>, vector<1x8x256xf32>,
    %83 = vector.extract_strided_slice %78 {offsets = [0, 256], sizes = [8, 256], strides = [1, 1]} : vector<8x512xf32> to vector<8x256xf32>
    %c1_69 = arith.constant 1 : index
    %c0_70 = arith.constant 0 : index
    %c0_71 = arith.constant 0 : index
    %84 = vector.load %arg5[%c1_69, %c0_70, %c0_71] : memref<2x8x256xf32, #tpu.memory_space<vmem>>, vector<1x8x256xf32>
    %85 = vector.shape_cast %84 : vector<1x8x256xf32> to vector<8x256xf32>
    %86 = vector.shape_cast %83 : vector<8x256xf32> to vector<1x8x256xf32>
    tpu.vector_store %arg5[%c1_69, %c0_70, %c0_71], %86 {strides = array<i32>} : memref<2x8x256xf32, #tpu.memory_space<vmem>>, vector<1x8x256xf32>,
    return
  }
  func.func @transform_0(%arg0: i32) -> (i32, i32, i32, i32) {
    %c0_i32 = arith.constant 0 : i32
    %c0_i32_0 = arith.constant 0 : i32
    %c0_i32_1 = arith.constant 0 : i32
    %c0_i32_2 = arith.constant 0 : i32
    %c0_i32_3 = arith.constant 0 : i32
    return %c0_i32, %c0_i32_0, %c0_i32_1, %c0_i32_2 : i32, i32, i32, i32
  }
  func.func @transform_1(%arg0: i32) -> (i32, i32) {
    %c0_i32 = arith.constant 0 : i32
    %c0_i32_0 = arith.constant 0 : i32
    %c0_i32_1 = arith.constant 0 : i32
    return %c0_i32, %c0_i32_0 : i32, i32
  }
  func.func @transform_2(%arg0: i32) -> (i32, i32) {
    %c0_i32 = arith.constant 0 : i32
    %c0_i32_0 = arith.constant 0 : i32
    %c0_i32_1 = arith.constant 0 : i32
    return %c0_i32, %c0_i32_0 : i32, i32
  }
  func.func @transform_3(%arg0: i32) -> (i32, i32, i32) {
    %c0_i32 = arith.constant 0 : i32
    %c0_i32_0 = arith.constant 0 : i32
    %c0_i32_1 = arith.constant 0 : i32
    %c0_i32_2 = arith.constant 0 : i32
    return %c0_i32, %c0_i32_0, %c0_i32_1 : i32, i32, i32
  }
  func.func @transform_4(%arg0: i32) -> (i32, i32, i32) {
    %c0_i32 = arith.constant 0 : i32
    %c0_i32_0 = arith.constant 0 : i32
    %c0_i32_1 = arith.constant 0 : i32
    %c0_i32_2 = arith.constant 0 : i32
    return %c0_i32, %c0_i32_0, %c0_i32_1 : i32, i32, i32
  }
}

</mosaic_0001>

<llo_original>
// kernel: conv_block.1
$region0: #{conv_block.1}
  #allocation0 [shape = 'u32[]', space=smem, size = 0x4, offset = 0x4, fixed_abs, tag = 'smem constant byte address 0x4 - core index']
  #allocation1 [shape = 'u32[144,128]{1,0:T(1,128)}', space=vmem, size = 0x12000, scoped, tag = 'internal scratch']
  #allocation2 [shape = 'f32[36,512]{1,0:T(8,128)}', space=vmem, size = 0x14000, scoped, tag = 'scratch operand']
  %s0 = inlined_call_operand.vmem [shape: f32[2,3,4,384], index: 0, kind: input, shape index: {}]
  %s1 = inlined_call_operand.vmem [shape: f32[8,36], index: 1, kind: input, shape index: {}]
  %s2 = inlined_call_operand.vmem [shape: f32[8,1], index: 2, kind: input, shape index: {}]
  %s3 = inlined_call_operand.vmem [shape: f32[2,8,1], index: 3, kind: input, shape index: {}]
  %s4 = inlined_call_operand.vmem [shape: f32[2,8,256], index: 4, kind: output, shape index: {}]
  %s5 = sld [smem:[#allocation0]]
  $region26: #{conv_block.1} parent=0
    _
  %s7 = ssub.s32 1, %s5
  %s8 = scalar_select 0, %s7, %s5
  // Predicated region
  $region2: #{conv_block.1} parent=0 // pred_check
    _
  $region3: #{conv_block.1} parent=0 // pred_check_branch
    %10 = sbr.rel (0) target = $region5
  $region4: #{conv_block.1} parent=0 // pred_region
    _
  $region5: #{conv_block.1} parent=0 // pred_fallthru
    _
  // Predicated region
  $region6: #{conv_block.1} parent=0 // pred_check
    _
  $region7: #{conv_block.1} parent=0 // pred_check_branch
    %12 = sbr.rel (0) target = $region9
  $region8: #{conv_block.1} parent=0 // pred_region
    _
  $region9: #{conv_block.1} parent=0 // pred_fallthru
    _
  // Predicated region
  $region10: #{conv_block.1} parent=0 // pred_check
    _
  $region11: #{conv_block.1} parent=0 // pred_check_branch
    %14 = sbr.rel (0) target = $region13
  $region12: #{conv_block.1} parent=0 // pred_region
    _
  $region13: #{conv_block.1} parent=0 // pred_fallthru
    _
  // Predicated region
  $region14: #{conv_block.1} parent=0 // pred_check
    _
  $region15: #{conv_block.1} parent=0 // pred_check_branch
    %16 = sbr.rel (0) target = $region17
  $region16: #{conv_block.1} parent=0 // pred_region
    _
  $region17: #{conv_block.1} parent=0 // pred_fallthru
    _
  %v17 = vld [vmem:[%s0] sm:$0xff]
  %v18 = vld [vmem:[%s0 + $0x8] sm:$0xf]
  %v20 = vcombine.high %v17, %v17
  %22 = vst [vmem:[#allocation2] sm:$0xf] %v17
  %23 = vst [vmem:[#allocation2 + $0x8] sm:$0xf] %v20
  %v25 = vcombine.low %v17, %v17
  %v26 = vcombine.low %v18, %v18
  %27 = vrot.lane.b32.xlu0 %v25, 112
  %v28 = vpop.permute.xlu0 %27
  %29 = vrot.lane.b32.xlu0 %v17, 112
  %v30 = vpop.permute.xlu0 %29
  %31 = vrot.lane.b32.xlu0 %v26, 112
  %v32 = vpop.permute.xlu0 %31
  %vm33 = vcmask 916480
  %v34 = vsel %vm33, %v28, %v30
  %v35 = vsel %vm33, %v30, %v32
  %38 = vst [vmem:[#allocation2 + $0x20] sm:$0xf0] %v34
  %39 = vst [vmem:[#allocation2 + $0x28] sm:$0xf0] %v35
  %40 = vrot.lane.b32.xlu0 %v17, 96
  %v41 = vpop.permute.xlu0 %40
  %42 = vrot.lane.b32.xlu0 %v20, 96
  %v43 = vpop.permute.xlu0 %42
  %44 = vrot.lane.b32.xlu0 %v18, 96
  %v45 = vpop.permute.xlu0 %44
  %vm46 = vcmask 785408
  %v47 = vsel %vm46, %v41, %v43
  %v48 = vsel %vm46, %v43, %v45
  %51 = vst [vmem:[#allocation2 + $0x60] sm:$0xf] %v47
  %52 = vst [vmem:[#allocation2 + $0x68] sm:$0xf] %v48
  %s53 = scalar_lea.vmem %s0, 12
  %v54 = vld [vmem:[%s53] sm:$0xff]
  %v55 = vld [vmem:[%s53 + $0x8] sm:$0xf]
  %v57 = vcombine.low %v54, %v54
  %59 = vst [vmem:[#allocation2] sm:$0xf0] %v57
  %60 = vst [vmem:[#allocation2 + $0x8] sm:$0xf0] %v54
  %v62 = vcombine.high %v54, %v54
  %63 = vrot.lane.b32.xlu0 %v54, 112
  %v64 = vpop.permute.xlu0 %63
  %65 = vrot.lane.b32.xlu0 %v62, 112
  %v66 = vpop.permute.xlu0 %65
  %67 = vrot.lane.b32.xlu0 %v55, 112
  %v68 = vpop.permute.xlu0 %67
  %v69 = vsel %vm33, %v64, %v66
  %v70 = vsel %vm33, %v66, %v68
  %73 = vst [vmem:[#allocation2 + $0x40] sm:$0xf] %v69
  %74 = vst [vmem:[#allocation2 + $0x48] sm:$0xf] %v70
  %v75 = vcombine.low %v55, %v55
  %76 = vrot.lane.b32.xlu0 %v57, 96
  %v77 = vpop.permute.xlu0 %76
  %78 = vrot.lane.b32.xlu0 %v54, 96
  %v79 = vpop.permute.xlu0 %78
  %80 = vrot.lane.b32.xlu0 %v75, 96
  %v81 = vpop.permute.xlu0 %80
  %v82 = vsel %vm46, %v77, %v79
  %v83 = vsel %vm46, %v79, %v81
  %86 = vst [vmem:[#allocation2 + $0x60] sm:$0xf0] %v82
  %87 = vst [vmem:[#allocation2 + $0x68] sm:$0xf0] %v83
  %s88 = scalar_lea.vmem %s0, 24
  %v89 = vld [vmem:[%s88] sm:$0xff]
  %v90 = vld [vmem:[%s88 + $0x8] sm:$0xf]
  %v92 = vcombine.high %v89, %v89
  %94 = vst [vmem:[#allocation2 + $0x20] sm:$0xf] %v89
  %95 = vst [vmem:[#allocation2 + $0x28] sm:$0xf] %v92
  %v97 = vcombine.low %v89, %v89
  %v98 = vcombine.low %v90, %v90
  %99 = vrot.lane.b32.xlu0 %v97, 112
  %v100 = vpop.permute.xlu0 %99
  %101 = vrot.lane.b32.xlu0 %v89, 112
  %v102 = vpop.permute.xlu0 %101
  %103 = vrot.lane.b32.xlu0 %v98, 112
  %v104 = vpop.permute.xlu0 %103
  %v105 = vsel %vm33, %v100, %v102
  %v106 = vsel %vm33, %v102, %v104
  %109 = vst [vmem:[#allocation2 + $0x40] sm:$0xf0] %v105
  %110 = vst [vmem:[#allocation2 + $0x48] sm:$0xf0] %v106
  %111 = vrot.lane.b32.xlu0 %v89, 96
  %v112 = vpop.permute.xlu0 %111
  %113 = vrot.lane.b32.xlu0 %v92, 96
  %v114 = vpop.permute.xlu0 %113
  %115 = vrot.lane.b32.xlu0 %v90, 96
  %v116 = vpop.permute.xlu0 %115
  %v117 = vsel %vm46, %v112, %v114
  %v118 = vsel %vm46, %v114, %v116
  %121 = vst [vmem:[#allocation2 + $0x80] sm:$0xf] %v117
  %122 = vst [vmem:[#allocation2 + $0x88] sm:$0xf] %v118
  %s123 = scalar_lea.vmem %s0, 36
  %v124 = vld [vmem:[%s123] sm:$0xff]
  %v125 = vld [vmem:[%s123 + $0x8] sm:$0xf]
  %v127 = vcombine.high %v124, %v124
  %129 = vst [vmem:[#allocation2 + $0x10] sm:$0xf] %v124
  %130 = vst [vmem:[#allocation2 + $0x18] sm:$0xf] %v127
  %v132 = vcombine.low %v124, %v124
  %v133 = vcombine.low %v125, %v125
  %134 = vrot.lane.b32.xlu0 %v132, 112
  %v135 = vpop.permute.xlu0 %134
  %136 = vrot.lane.b32.xlu0 %v124, 112
  %v137 = vpop.permute.xlu0 %136
  %138 = vrot.lane.b32.xlu0 %v133, 112
  %v139 = vpop.permute.xlu0 %138
  %v140 = vsel %vm33, %v135, %v137
  %v141 = vsel %vm33, %v137, %v139
  %144 = vst [vmem:[#allocation2 + $0x30] sm:$0xf0] %v140
  %145 = vst [vmem:[#allocation2 + $0x38] sm:$0xf0] %v141
  %146 = vrot.lane.b32.xlu0 %v124, 96
  %v147 = vpop.permute.xlu0 %146
  %148 = vrot.lane.b32.xlu0 %v127, 96
  %v149 = vpop.permute.xlu0 %148
  %150 = vrot.lane.b32.xlu0 %v125, 96
  %v151 = vpop.permute.xlu0 %150
  %v152 = vsel %vm46, %v147, %v149
  %v153 = vsel %vm46, %v149, %v151
  %156 = vst [vmem:[#allocation2 + $0x70] sm:$0xf] %v152
  %157 = vst [vmem:[#allocation2 + $0x78] sm:$0xf] %v153
  %s158 = scalar_lea.vmem %s0, 48
  %v159 = vld [vmem:[%s158] sm:$0xff]
  %v160 = vld [vmem:[%s158 + $0x8] sm:$0xf]
  %v162 = vcombine.low %v159, %v159
  %164 = vst [vmem:[#allocation2 + $0x10] sm:$0xf0] %v162
  %165 = vst [vmem:[#allocation2 + $0x18] sm:$0xf0] %v159
  %v167 = vcombine.high %v159, %v159
  %168 = vrot.lane.b32.xlu0 %v159, 112
  %v169 = vpop.permute.xlu0 %168
  %170 = vrot.lane.b32.xlu0 %v167, 112
  %v171 = vpop.permute.xlu0 %170
  %172 = vrot.lane.b32.xlu0 %v160, 112
  %v173 = vpop.permute.xlu0 %172
  %v174 = vsel %vm33, %v169, %v171
  %v175 = vsel %vm33, %v171, %v173
  %178 = vst [vmem:[#allocation2 + $0x50] sm:$0xf] %v174
  %179 = vst [vmem:[#allocation2 + $0x58] sm:$0xf] %v175
  %v180 = vcombine.low %v160, %v160
  %181 = vrot.lane.b32.xlu0 %v162, 96
  %v182 = vpop.permute.xlu0 %181
  %183 = vrot.lane.b32.xlu0 %v159, 96
  %v184 = vpop.permute.xlu0 %183
  %185 = vrot.lane.b32.xlu0 %v180, 96
  %v186 = vpop.permute.xlu0 %185
  %v187 = vsel %vm46, %v182, %v184
  %v188 = vsel %vm46, %v184, %v186
  %191 = vst [vmem:[#allocation2 + $0x70] sm:$0xf0] %v187
  %192 = vst [vmem:[#allocation2 + $0x78] sm:$0xf0] %v188
  %s193 = scalar_lea.vmem %s0, 60
  %v194 = vld [vmem:[%s193] sm:$0xff]
  %v195 = vld [vmem:[%s193 + $0x8] sm:$0xf]
  %v197 = vcombine.high %v194, %v194
  %199 = vst [vmem:[#allocation2 + $0x30] sm:$0xf] %v194
  %200 = vst [vmem:[#allocation2 + $0x38] sm:$0xf] %v197
  %v202 = vcombine.low %v194, %v194
  %v203 = vcombine.low %v195, %v195
  %204 = vrot.lane.b32.xlu0 %v202, 112
  %v205 = vpop.permute.xlu0 %204
  %206 = vrot.lane.b32.xlu0 %v194, 112
  %v207 = vpop.permute.xlu0 %206
  %208 = vrot.lane.b32.xlu0 %v203, 112
  %v209 = vpop.permute.xlu0 %208
  %v210 = vsel %vm33, %v205, %v207
  %v211 = vsel %vm33, %v207, %v209
  %214 = vst [vmem:[#allocation2 + $0x50] sm:$0xf0] %v210
  %215 = vst [vmem:[#allocation2 + $0x58] sm:$0xf0] %v211
  %216 = vrot.lane.b32.xlu0 %v194, 96
  %v217 = vpop.permute.xlu0 %216
  %218 = vrot.lane.b32.xlu0 %v197, 96
  %v219 = vpop.permute.xlu0 %218
  %220 = vrot.lane.b32.xlu0 %v195, 96
  %v221 = vpop.permute.xlu0 %220
  %v222 = vsel %vm46, %v217, %v219
  %v223 = vsel %vm46, %v219, %v221
  %226 = vst [vmem:[#allocation2 + $0x90] sm:$0xf] %v222
  %227 = vst [vmem:[#allocation2 + $0x98] sm:$0xf] %v223
  %v228 = vld [vmem:[%s1] sm:$0xff]
  %v229 = vld [vmem:[#allocation2] sm:$0xff]
  %v230 = vld [vmem:[#allocation2 + $0x8] sm:$0xff]
  %v231 = vld [vmem:[#allocation2 + $0x10] sm:$0xff]
  %v232 = vld [vmem:[#allocation2 + $0x18] sm:$0xff]
  %v233 = vld [vmem:[#allocation2 + $0x20] sm:$0xff]
  %v234 = vld [vmem:[#allocation2 + $0x28] sm:$0xff]
  %v235 = vld [vmem:[#allocation2 + $0x30] sm:$0xff]
  %v236 = vld [vmem:[#allocation2 + $0x38] sm:$0xff]
  %v237 = vld [vmem:[#allocation2 + $0x40] sm:$0xff]
  %v238 = vld [vmem:[#allocation2 + $0x48] sm:$0xff]
  %v239 = vld [vmem:[#allocation2 + $0x50] sm:$0xff]
  %v240 = vld [vmem:[#allocation2 + $0x58] sm:$0xff]
  %v241 = vld [vmem:[#allocation2 + $0x60] sm:$0xff]
  %v242 = vld [vmem:[#allocation2 + $0x68] sm:$0xff]
  %v243 = vld [vmem:[#allocation2 + $0x70] sm:$0xff]
  %v244 = vld [vmem:[#allocation2 + $0x78] sm:$0xff]
  %v245 = vld [vmem:[#allocation2 + $0x80] sm:$0xf]
  %v246 = vld [vmem:[#allocation2 + $0x88] sm:$0xf]
  %v247 = vld [vmem:[#allocation2 + $0x90] sm:$0xf]
  %v248 = vld [vmem:[#allocation2 + $0x98] sm:$0xf]
  %v249 = vld [vmem:[%s2] sm:$0xff]
  %251 = vset.pattern.permute.xlu0 0
  %252 = vperm.xlu0 %251, %v249
  %v253 = vpop.permute.xlu0 %252
  %vm255 = vcmask 293888
  %v257 = vsel %vm255, %v228, 0
  %vm259 = vcmask 1043456
  %v261 = vsel %vm259, %v245, 0
  %v264 = vsel %vm259, %v246, 0
  %v267 = vsel %vm259, %v247, 0
  %v270 = vsel %vm259, %v248, 0
  %272 = vmatprep.subr.mxu0 %v230
  %273 = vmatpush1.msra.mxu0 %v229
  %274 = vmatprep.subr.mxu0 %v234
  %275 = vmatpush1.msra.mxu0 %v233
  %276 = vmatprep.subr.mxu0 %v238
  %277 = vmatpush1.msra.mxu0 %v237
  %278 = vmatprep.subr.mxu0 %v242
  %279 = vmatpush1.msra.mxu0 %v241
  %280 = vmatprep.subr.mxu0 %v264
  %281 = vmatpush1.msra.mxu0 %v261
  %282 = vmatprep.subr.mxu0 0.0
  %283 = vmatpush1.msra.mxu0 0.0
  %284 = vmatprep.subr.mxu0 0.0
  %285 = vmatpush1.msra.mxu0 0.0
  %286 = vmatprep.subr.mxu0 0.0
  %287 = vmatpush1.msra.mxu0 0.0
  %288 = vmatprep.subr.mxu0 0.0
  %289 = vmatpush1.msra.mxu0 0.0
  %290 = vmatprep.subr.mxu0 0.0
  %291 = vmatpush1.msra.mxu0 0.0
  %292 = vmatprep.subr.mxu0 0.0
  %293 = vmatpush1.msra.mxu0 0.0
  %294 = vmatprep.subr.mxu0 0.0
  %295 = vmatpush1.msra.mxu0 0.0
  %296 = vmatprep.subr.mxu0 0.0
  %297 = vmatpush1.msra.mxu0 0.0
  %298 = vmatprep.subr.mxu0 0.0
  %299 = vmatpush1.msra.mxu0 0.0
  %300 = vmatprep.subr.mxu0 0.0
  %301 = vmatpush1.msra.mxu0 0.0
  %302 = vmatprep.subr.mxu0 0.0
  %303 = vmatpush1.msra.mxu0 0.0
  %304 = vmatprep.subr.mxu0 0.0
  %305 = vmatpush1.msra.mxu0 0.0
  %306 = vmatprep.subr.mxu0 0.0
  %307 = vmatpush1.msra.mxu0 0.0
  %308 = vmatprep.subr.mxu0 0.0
  %309 = vmatpush1.msra.mxu0 0.0
  %310 = vmatprep.subr.mxu0 0.0
  %311 = vmatpush1.msra.mxu0 0.0
  %312 = vmatprep.subr.mxu0 0.0
  %313 = vmatpush1.msra.mxu0 0.0
  %314 = vmatprep.subr.mxu0 0.0
  %315 = vmatpush1.msra.mxu0 0.0
  %316 = vmatprep.subr.mxu0 0.0
  %317 = vmatpush1.msra.mxu0 0.0
  %318 = vmatprep.subr.mxu0 0.0
  %319 = vmatpush1.msra.mxu0 0.0
  %320 = vmatprep.subr.mxu0 0.0
  %321 = vmatpush1.msra.mxu0 0.0
  %322 = vmatprep.subr.mxu0 0.0
  %323 = vmatpush1.msra.mxu0 0.0
  %324 = vmatprep.subr.mxu0 0.0
  %325 = vmatpush1.msra.mxu0 0.0
  %326 = vmatprep.subr.mxu0 0.0
  %327 = vmatpush1.msra.mxu0 0.0
  %328 = vmatprep.subr.mxu0 0.0
  %329 = vmatpush1.msra.mxu0 0.0
  %330 = vmatprep.subr.mxu0 0.0
  %331 = vmatpush1.msra.mxu0 0.0
  %332 = vmatprep.subr.mxu0 0.0
  %333 = vmatpush1.msra.mxu0 0.0
  %334 = vmatprep.subr.mxu0 0.0
  %335 = vmatpush1.msra.mxu0 0.0
  %336 = vmatprep.mubr.f32.mxu0 0.0
  %337 = vmatmul.mubr.f32.gmra.mrb[0].mxu0 %v257
  %v338 = vpop.f32.mrb[0].mxu0
  %v339 = vadd.f32 %v253, %v338
  %v340 = vpop.f32.mrb[0].mxu0
  %v341 = vadd.f32 %v253, %v340
  %342 = vdwg.mxu0
  %343 = vmatprep.subr.mxu0 %v232
  %344 = vmatpush1.msra.mxu0 %v231
  %345 = vmatprep.subr.mxu0 %v236
  %346 = vmatpush1.msra.mxu0 %v235
  %347 = vmatprep.subr.mxu0 %v240
  %348 = vmatpush1.msra.mxu0 %v239
  %349 = vmatprep.subr.mxu0 %v244
  %350 = vmatpush1.msra.mxu0 %v243
  %351 = vmatprep.subr.mxu0 %v270
  %352 = vmatpush1.msra.mxu0 %v267
  %353 = vmatprep.subr.mxu0 0.0
  %354 = vmatpush1.msra.mxu0 0.0
  %355 = vmatprep.subr.mxu0 0.0
  %356 = vmatpush1.msra.mxu0 0.0
  %357 = vmatprep.subr.mxu0 0.0
  %358 = vmatpush1.msra.mxu0 0.0
  %359 = vmatprep.subr.mxu0 0.0
  %360 = vmatpush1.msra.mxu0 0.0
  %361 = vmatprep.subr.mxu0 0.0
  %362 = vmatpush1.msra.mxu0 0.0
  %363 = vmatprep.subr.mxu0 0.0
  %364 = vmatpush1.msra.mxu0 0.0
  %365 = vmatprep.subr.mxu0 0.0
  %366 = vmatpush1.msra.mxu0 0.0
  %367 = vmatprep.subr.mxu0 0.0
  %368 = vmatpush1.msra.mxu0 0.0
  %369 = vmatprep.subr.mxu0 0.0
  %370 = vmatpush1.msra.mxu0 0.0
  %371 = vmatprep.subr.mxu0 0.0
  %372 = vmatpush1.msra.mxu0 0.0
  %373 = vmatprep.subr.mxu0 0.0
  %374 = vmatpush1.msra.mxu0 0.0
  %375 = vmatprep.subr.mxu0 0.0
  %376 = vmatpush1.msra.mxu0 0.0
  %377 = vmatprep.subr.mxu0 0.0
  %378 = vmatpush1.msra.mxu0 0.0
  %379 = vmatprep.subr.mxu0 0.0
  %380 = vmatpush1.msra.mxu0 0.0
  %381 = vmatprep.subr.mxu0 0.0
  %382 = vmatpush1.msra.mxu0 0.0
  %383 = vmatprep.subr.mxu0 0.0
  %384 = vmatpush1.msra.mxu0 0.0
  %385 = vmatprep.subr.mxu0 0.0
  %386 = vmatpush1.msra.mxu0 0.0
  %387 = vmatprep.subr.mxu0 0.0
  %388 = vmatpush1.msra.mxu0 0.0
  %389 = vmatprep.subr.mxu0 0.0
  %390 = vmatpush1.msra.mxu0 0.0
  %391 = vmatprep.subr.mxu0 0.0
  %392 = vmatpush1.msra.mxu0 0.0
  %393 = vmatprep.subr.mxu0 0.0
  %394 = vmatpush1.msra.mxu0 0.0
  %395 = vmatprep.subr.mxu0 0.0
  %396 = vmatpush1.msra.mxu0 0.0
  %397 = vmatprep.subr.mxu0 0.0
  %398 = vmatpush1.msra.mxu0 0.0
  %399 = vmatprep.subr.mxu0 0.0
  %400 = vmatpush1.msra.mxu0 0.0
  %401 = vmatprep.subr.mxu0 0.0
  %402 = vmatpush1.msra.mxu0 0.0
  %403 = vmatprep.subr.mxu0 0.0
  %404 = vmatpush1.msra.mxu0 0.0
  %405 = vmatprep.subr.mxu0 0.0
  %406 = vmatpush1.msra.mxu0 0.0
  %407 = vmatprep.mubr.f32.mxu0 0.0
  %408 = vmatmul.mubr.f32.gmra.mrb[0].mxu0 %v257
  %v409 = vpop.f32.mrb[0].mxu0
  %v410 = vadd.f32 %v253, %v409
  %v411 = vpop.f32.mrb[0].mxu0
  %v412 = vadd.f32 %v253, %v411
  %413 = vdwg.mxu0
  %v414 = vadd.f32 %v339, %v341
  %v415 = vadd.f32 %v414, %v410
  %v416 = vadd.f32 %v415, %v412
  %417 = vadd.xlane.f32.xlu0 %v416
  %v418 = vpop.xlane.xlu0 %417
  %v419 = vmul.f32 %v418, 0.001953125
  %v420 = vsub.f32 %v339, %v419
  %v421 = vsub.f32 %v341, %v419
  %v422 = vsub.f32 %v410, %v419
  %v423 = vsub.f32 %v412, %v419
  %v424 = vmul.f32 %v420, %v420
  %v425 = vmul.f32 %v421, %v421
  %v426 = vmul.f32 %v422, %v422
  %v427 = vmul.f32 %v423, %v423
  %v428 = vadd.f32 %v424, %v425
  %v429 = vadd.f32 %v428, %v426
  %v430 = vadd.f32 %v429, %v427
  %431 = vadd.xlane.f32.xlu0 %v430
  %v432 = vpop.xlane.xlu0 %431
  %v433 = vmul.f32 %v432, 0.001953125
  %v434 = vld [vmem:[%s3] sm:$0xff]
  %v435 = vadd.f32 %v433, 1e-05
  %v436 = vrsqrt.pop %v435
  %v437 = vmul.f32 %v434, %v436
  %439 = vset.pattern.permute.xlu0 0
  %440 = vperm.xlu0 %439, %v437
  %v441 = vpop.permute.xlu0 %440
  %v443 = vmul.f32 %v420, %v441
  %v444 = vmul.f32 %v421, %v441
  %v445 = vmul.f32 %v422, %v441
  %v446 = vmul.f32 %v423, %v441
  %s447 = scalar_lea.vmem %s3, 8
  %v448 = vld [vmem:[%s447] sm:$0xff]
  %450 = vset.pattern.permute.xlu0 0
  %451 = vperm.xlu0 %450, %v448
  %v452 = vpop.permute.xlu0 %451
  %v454 = vadd.f32 %v443, %v452
  %v455 = vadd.f32 %v444, %v452
  %v456 = vadd.f32 %v445, %v452
  %v457 = vadd.f32 %v446, %v452
  %v458 = vmax.f32 %v454, 0.0
  %v459 = vmax.f32 %v455, 0.0
  %v460 = vmax.f32 %v456, 0.0
  %v461 = vmax.f32 %v457, 0.0
  %462 = vst [vmem:[%s4] sm:$0xff] %v458
  %463 = vst [vmem:[%s4 + $0x8] sm:$0xff] %v459
  %s464 = scalar_lea.vmem %s4, 16
  %465 = vst [vmem:[%s464] sm:$0xff] %v460
  %466 = vst [vmem:[%s464 + $0x8] sm:$0xff] %v461
  // Predicated region
  $region18: #{conv_block.1} parent=0 // pred_check
    _
  $region19: #{conv_block.1} parent=0 // pred_check_branch
    %468 = sbr.rel (0) target = $region21
  $region20: #{conv_block.1} parent=0 // pred_region
    _
  $region21: #{conv_block.1} parent=0 // pred_fallthru
    _
  // Predicated region
  $region22: #{conv_block.1} parent=0 // pred_check
    _
  $region23: #{conv_block.1} parent=0 // pred_check_branch
    %470 = sbr.rel (0) target = $region25
  $region24: #{conv_block.1} parent=0 // pred_region
    _
  $region25: #{conv_block.1} parent=0 // pred_fallthru
    _

</llo_original>
